<compile_context>
chip_gen: v5e
topology: v5e:2x2
jax: 0.10.0
libtpu: 0.0.40
codegen_flags: <defaults>
</compile_context>

<pallas_src>
import functools

import jax
import jax.numpy as jnp
from jax.experimental import pallas as pl
from jax.experimental.pallas import tpu as pltpu


def _gelu_tanh(x):
    c = 0.7978845608028654  # sqrt(2/pi)
    return 0.5 * x * (1.0 + jnp.tanh(c * (x + 0.044715 * (x * x * x))))


@functools.lru_cache(maxsize=None)
def _roll_sign() -> int:
    """Detect the rotate convention of pltpu.roll on this backend.

    Returns +1 if pltpu.roll matches jnp.roll (out[i] = x[(i - shift) % n]),
    -1 otherwise.  Only the sign matters; borders are handled by zero padding
    and source-side column masks either way.
    """
    def kernel(x_ref, o_ref):
        o_ref[...] = pltpu.roll(x_ref[...], shift=1, axis=1)

    x = jnp.arange(128, dtype=jnp.int32).reshape(1, 128)
    out = pl.pallas_call(
        kernel, out_shape=jax.ShapeDtypeStruct((1, 128), jnp.int32))(x)
    return 1 if int(out[0, 0]) == 127 else -1


def _gdff_kernel(x_ref, wf_ref, b_ref, wo_ref, mask_ref, o_ref, *,
                 width: int, roll_sign: int, matmul_dtype):
    """One (batch, row-tile) step: folded project_in+dwconv, gate, project_out."""
    L = x_ref.shape[-1]            # lane-padded halo'd tile length (multiple of 128)
    Tw = o_ref.shape[-1]           # interior tile length (tile_rows * width)
    hp2 = b_ref.shape[0]
    hp = hp2 // 2

    x = x_ref[0, 0].astype(jnp.float32)                    # (c, L)

    # Source-side column masks: zero the column that would wrap around the image
    # edge after the roll.  Only dj = +/-1 taps need a mask; vertical wraps always
    # land in the zero halo/pad rows.
    x_dj_m1 = x * mask_ref[0]      # feeds taps with dj = -1 (column w-1 zeroed)
    x_dj_p1 = x * mask_ref[1]      # feeds taps with dj = +1 (column 0   zeroed)
    srcs = {-1: x_dj_m1, 0: x, 1: x_dj_p1}

    def shifted(src, off):
        # out[p] = src[p + off]; wrap-around lands in zero padding / masked columns.
        if off == 0:
            return src
        return pltpu.roll(src, shift=(-roll_sign * off) % L, axis=1)

    # z = sum_t (d_t * W_in) @ shift_t(x) + b_dw, with BOTH gate halves stacked
    # along the sublane axis: (2*hp, L).  Tap order t = (di+1)*3 + (dj+1) matches
    # the row-major flattening of the (2*hidden, 1, 3, 3) depthwise weight.
    acc = None
    t = 0
    for di in (-1, 0, 1):
        for dj in (-1, 0, 1):
            lhs = wf_ref[t].astype(matmul_dtype)                      # (2*hp, c)
            rhs = shifted(srcs[dj], di * width + dj).astype(matmul_dtype)
            part = jnp.dot(lhs, rhs, preferred_element_type=jnp.float32)
            acc = part if acc is None else acc + part
            t += 1
    z = acc + b_ref[...]                                              # (2*hp, L)

    z1 = z[:hp]                    # sublane-aligned halves (hp % 8 == 0)
    z2 = z[hp:]
    g = _gelu_tanh(z1) * z2                                           # (hp, L)

    out = jnp.dot(wo_ref[...].astype(matmul_dtype), g.astype(matmul_dtype),
                  preferred_element_type=jnp.float32)                 # (c, L)
    # Drop the one-row halo on each side of the tile.
    o_ref[0] = out[:, width:width + Tw].astype(o_ref.dtype)


def _pick_tile_rows(h, w, c, hp, budget_bytes=12 * 2**20):
    """Largest row-tile whose per-step f32 activation working set fits the budget."""
    def ok(t):
        return h % t == 0 and (t == h or (t * w) % 128 == 0)

    def ws(t):
        lpad = ((t + 2) * w + 127) // 128 * 128
        return 4 * lpad * (5 * hp + 6 * c)

    cands = [t for t in range(1, h + 1) if ok(t)]
    fitting = [t for t in cands if ws(t) <= budget_bytes]
    return max(fitting) if fitting else min(cands)


def _vmem_estimate(c, hp, l_pad, tw):
    f = 4  # f32 bytes
    work = f * l_pad * (5 * hp + 7 * c)            # z, temps, g, x/xl/xr, out
    io = f * (2 * c * l_pad + 2 * c * tw + 4 * l_pad
              + 2 * (9 * 2 * hp * c + 2 * hp + c * hp))   # double-buffered blocks
    return work + io


def gated_dconv_feedforward(x, w_in, w_dw, b_dw, w_out, *, tile_rows=None,
                            matmul_dtype=jnp.float32):
    """Forward pass of Gated_Dconv_FeedForward as one fused Pallas kernel.

    x     : (b, c, h, w)
    w_in  : (2*hidden, c, 1, 1)   project_in weight  (no bias)
    w_dw  : (2*hidden, 1, 3, 3)   depthwise conv weight
    b_dw  : (2*hidden,)           depthwise conv bias
    w_out : (c, hidden, 1, 1)     project_out weight (no bias)

    matmul_dtype: jnp.bfloat16 is the recommended production setting for v6e/v7x
    (and v5e's MXU) when c / hidden are large; f32 default keeps tightest accuracy.
    """
    b, c, h, w = x.shape
    hidden2 = w_in.shape[0]
    hidden = hidden2 // 2
    hp = ((hidden + 7) // 8) * 8                  # pad each gate half to a sublane multiple

    if tile_rows is None:
        tile_rows = _pick_tile_rows(h, w, c, hp)
    th = tile_rows
    if h % th != 0:
        # TODO(synk): support ragged last row-tile (h not divisible by tile_rows).
        raise ValueError("tile_rows must divide h")
    nt = h // th
    tw = th * w
    if nt > 1 and tw % 128 != 0:
        raise ValueError("tile_rows * w must be a multiple of 128 when tiling")
    l_halo = (th + 2) * w                         # tile + one halo row above and below
    l_pad = ((l_halo + 127) // 128) * 128         # lane-pad so in-kernel rolls stay aligned

    roll_sign = _roll_sign()
    f32 = jnp.float32

    # ---------- host-side layout plumbing (no compute hoisted out of the kernel) ----------
    # Zero row above/below the image (removes all vertical border masks), then gather
    # per-tile halo'd row windows into a non-overlapping (b, nt, c, L) block layout so
    # the standard BlockSpec pipeline double-buffers the input.
    # TODO(synk): a manual-DMA halo (memory_space=pl.ANY) would avoid the ~(th+2)/th
    #             input duplication at the cost of hand-rolled prefetch.
    x_pad = jnp.pad(x, ((0, 0), (0, 0), (1, 1), (0, 0)))                 # (b, c, h+2, w)
    row_idx = (jnp.arange(nt)[:, None] * th + jnp.arange(th + 2)[None, :]).reshape(-1)
    x_tiles = jnp.take(x_pad, row_idx, axis=2)                            # (b, c, nt*(th+2), w)
    x_tiles = (x_tiles.reshape(b, c, nt, th + 2, w)
               .transpose(0, 2, 1, 3, 4)
               .reshape(b, nt, c, l_halo))
    x_tiles = jnp.pad(x_tiles, ((0, 0), (0, 0), (0, 0), (0, l_pad - l_halo)))

    # Fold the depthwise 3x3 taps into project_in:  W_t = d[:, t, None] * W_in.
    wi = w_in.reshape(hidden2, c).astype(f32)
    d = w_dw.reshape(hidden2, 9).astype(f32)
    w_fold = d[:, :, None] * wi[:, None, :]                               # (2*hidden, 9, c)
    wf = jnp.zeros((2 * hp, 9, c), f32)
    wf = wf.at[:hidden].set(w_fold[:hidden]).at[hp:hp + hidden].set(w_fold[hidden:])
    wf = jnp.transpose(wf, (1, 0, 2))                                     # (9, 2*hp, c)
    bb = jnp.zeros((2 * hp, 1), f32)
    bb = bb.at[:hidden, 0].set(b_dw[:hidden].astype(f32))
    bb = bb.at[hp:hp + hidden, 0].set(b_dw[hidden:].astype(f32))
    wo = jnp.zeros((c, hp), f32).at[:, :hidden].set(w_out.reshape(c, hidden).astype(f32))

    # Column-edge masks applied to the *source* before rolling (period-w pattern).
    col = jnp.arange(l_pad) % w
    masks = jnp.stack([(col != w - 1), (col != 0)]).astype(f32).reshape(2, 1, l_pad)

    est = _vmem_estimate(c, hp, l_pad, tw)
    vmem_limit = int(min(60 * 2**20, max(32 * 2**20, 3 * est)))           # <= v7x 64 MiB/TC

    kernel = functools.partial(_gdff_kernel, width=w, roll_sign=roll_sign,
                               matmul_dtype=matmul_dtype)

    out3 = pl.pallas_call(
        kernel,
        out_shape=jax.ShapeDtypeStruct((b, c, h * w), x.dtype),
        grid_spec=pltpu.PrefetchScalarGridSpec(
            num_scalar_prefetch=0,
            grid=(b, nt),
            in_specs=[
                pl.BlockSpec((1, 1, c, l_pad), lambda bi, ti: (bi, ti, 0, 0)),  # halo'd x tile
                pl.BlockSpec((9, 2 * hp, c), lambda bi, ti: (0, 0, 0)),         # folded tap weights
                pl.BlockSpec((2 * hp, 1), lambda bi, ti: (0, 0)),               # dw bias (stacked halves)
                pl.BlockSpec((c, hp), lambda bi, ti: (0, 0)),                   # project_out weight
                pl.BlockSpec((2, 1, l_pad), lambda bi, ti: (0, 0, 0)),          # column-edge masks
            ],
            out_specs=pl.BlockSpec((1, c, tw), lambda bi, ti: (bi, 0, ti)),
        ),
        compiler_params=pltpu.CompilerParams(
            dimension_semantics=("parallel", "parallel"),
            vmem_limit_bytes=vmem_limit),
    )(x_tiles, wf, bb, wo, masks)

    return out3.reshape(b, c, h, w)


def _reference(x, w_in, w_dw, b_dw, w_out):
    """Plain-XLA reference (same tanh-GELU approximation as the kernel)."""
    hidden = w_out.shape[1]
    dn = ('NCHW', 'OIHW', 'NCHW')
    y = jax.lax.conv_general_dilated(x, w_in, (1, 1), 'VALID',
                                     dimension_numbers=dn)
    z = jax.lax.conv_general_dilated(y, w_dw, (1, 1), ((1, 1), (1, 1)),
                                     feature_group_count=w_dw.shape[0],
                                     dimension_numbers=dn)
    z = z + b_dw.reshape(1, -1, 1, 1)
    x1, x2 = z[:, :hidden], z[:, hidden:]
    g = _gelu_tanh(x1) * x2
    return jax.lax.conv_general_dilated(g, w_out, (1, 1), 'VALID',
                                        dimension_numbers=dn)


if __name__ == "__main__":
    key = jax.random.PRNGKey(0)
    kx, k1, k2, k3, k4 = jax.random.split(key, 5)

    b, c, h, w = 2, 4, 16, 16
    ffn_expansion_factor = 2.66
    hidden = int(c * ffn_expansion_factor)          # == 10, as in the module

    x = jax.random.normal(kx, (b, c, h, w), dtype=jnp.float32)
    w_in = jax.random.normal(k1, (2 * hidden, c, 1, 1), jnp.float32) / (c ** 0.5)
    w_dw = jax.random.normal(k2, (2 * hidden, 1, 3, 3), jnp.float32) / 3.0
    b_dw = jax.random.normal(k3, (2 * hidden,), jnp.float32) * 0.1
    w_out = jax.random.normal(k4, (c, hidden, 1, 1), jnp.float32) / (hidden ** 0.5)

    # tile_rows=8 -> 2 spatial tiles of 128 lanes each: exercises the halo'd tiling path.
    out = gated_dconv_feedforward(x, w_in, w_dw, b_dw, w_out, tile_rows=8)
    out = jax.block_until_ready(out)

    ref = _reference(x, w_in, w_dw, b_dw, w_out)
    if jnp.allclose(out, ref, atol=5e-3, rtol=5e-3):
        print("KERNEL_OK")
    else:
        print("MISMATCH: max abs err", float(jnp.max(jnp.abs(out - ref))))
</pallas_src>

<mosaic_0001>
module attributes {stable_mosaic.version = 11 : i64} {
  func.func @kernel(%arg0: memref<1x128xi32, #tpu.memory_space<vmem>>, %arg1: memref<1x128xi32, #tpu.memory_space<vmem>>) attributes {dimension_semantics = [], scalar_prefetch = 0 : i64, scratch_operands = 0 : i64, tpu.core_type = #tpu.core_type<tc>} {
    %c0 = arith.constant 0 : index
    %c0_0 = arith.constant 0 : index
    %0 = vector.load %arg0[%c0, %c0_0] : memref<1x128xi32, #tpu.memory_space<vmem>>, vector<1x128xi32>
    %c1_i32 = arith.constant 1 : i32
    %1 = tpu.dynamic_rotate %0 by %c1_i32 dim 1 : vector<1x128xi32>, i32 -> vector<1x128xi32>
    %c0_1 = arith.constant 0 : index
    %c0_2 = arith.constant 0 : index
    %2 = vector.load %arg1[%c0_1, %c0_2] : memref<1x128xi32, #tpu.memory_space<vmem>>, vector<1x128xi32>
    tpu.vector_store %arg1[%c0_1, %c0_2], %1 {strides = array<i32>} : memref<1x128xi32, #tpu.memory_space<vmem>>, vector<1x128xi32>,
    return
  }
}

</mosaic_0001>

<llo_original>
// kernel: tpu_custom_call.1
$region0: #{tpu_custom_call.1}
  #allocation0 [shape = 'u32[]', space=smem, size = 0x4, offset = 0x4, fixed_abs, tag = 'smem constant byte address 0x4 - core index']
  #allocation1 [shape = 'u32[72,128]{1,0:T(1,128)}', space=vmem, size = 0x9000, scoped, tag = 'internal scratch']
  %s0 = inlined_call_operand.hbm [shape: s32[1,128], index: 0, kind: input, shape index: {}]
  %s1 = inlined_call_operand.hbm [shape: s32[1,128], index: 1, kind: output, shape index: {}]
  %s2 = sld [smem:[#allocation0]]
  $region18: #{tpu_custom_call.1} parent=0
    _
  %s4 = ssub.s32 1, %s2
  %s5 = scalar_select 0, %s4, %s2
  $region1: #{tpu_custom_call.1} parent=0
    #allocation2 [shape = 'u8[512]{0}', space=vmem, size = 0x400, scoped, tag = 'input window, operand 0, single buffered']
    #allocation3 [shape = 's32[1]{0}', space=sflag, size = 0x4, scoped, tag = 'scoped memory for tpu_custom_call.1']
    #allocation4 [shape = 's32[1]{0}', space=sflag, size = 0x4, scoped, tag = 'scoped memory for tpu_custom_call.1']
    #allocation5 [shape = 'u8[512]{0}', space=vmem, size = 0x400, scoped, tag = 'output window, operand 0, single buffered']
    %6 = vsyncpa [#allocation3], 0
    %7 = vsyncpa [#allocation4], 0
    // Predicated region
    $region2: #{tpu_custom_call.1} parent=1 // pred_check
      _
    $region3: #{tpu_custom_call.1} parent=1 // pred_check_branch
      %9 = sbr.rel (0) target = $region5
    $region4: #{tpu_custom_call.1} parent=1 // pred_region
      %11 = vsyncadd [#allocation3], 0
      %s13 = sshll.u32 %s0, 4
      %s14 = int_to_ptr.hbm [resolvable:$true] %s13
      %s15 = sshll.u32 [#allocation2], 4
      %s16 = int_to_ptr.vmem [resolvable:$true] %s15
      %18 = dma.hbm_to_vmem [thread:$0]  %s14, 16, %s16, [#allocation3]
    $region5: #{tpu_custom_call.1} parent=1 // pred_fallthru
      _
    // Predicated region
    $region6: #{tpu_custom_call.1} parent=1 // pred_check
      _
    $region7: #{tpu_custom_call.1} parent=1 // pred_check_branch
      %20 = sbr.rel (0) target = $region9
    $region8: #{tpu_custom_call.1} parent=1 // pred_region
      %22 = dma.done [#allocation3], 16
    $region9: #{tpu_custom_call.1} parent=1 // pred_fallthru
      _
    %v23 = vld [vmem:[#allocation2] sm:$0x1]
    %24 = vrot.lane.b32.xlu0 %v23, 1
    %v25 = vpop.permute.xlu0 %24
    %26 = vst [vmem:[#allocation5] sm:$0x1] %v25
    // Predicated region
    $region10: #{tpu_custom_call.1} parent=1 // pred_check
      _
    $region11: #{tpu_custom_call.1} parent=1 // pred_check_branch
      %28 = sbr.rel (0) target = $region13
    $region12: #{tpu_custom_call.1} parent=1 // pred_region
      %30 = vsyncadd [#allocation4], 0
      %s32 = sshll.u32 [#allocation5], 4
      %s33 = int_to_ptr.vmem [resolvable:$true] %s32
      %s34 = sshll.u32 %s1, 4
      %s35 = int_to_ptr.hbm [resolvable:$true] %s34
      %37 = dma.vmem_to_hbm [thread:$0]  %s33, 16, %s35, [#allocation4]
    $region13: #{tpu_custom_call.1} parent=1 // pred_fallthru
      _
    // Predicated region
    $region14: #{tpu_custom_call.1} parent=1 // pred_check
      _
    $region15: #{tpu_custom_call.1} parent=1 // pred_check_branch
      %39 = sbr.rel (0) target = $region17
    $region16: #{tpu_custom_call.1} parent=1 // pred_region
      %41 = dma.done [#allocation4], 16
    $region17: #{tpu_custom_call.1} parent=1 // pred_fallthru
      _
    %42 = vsyncpa [#allocation3], 1
    %43 = vsyncpa [#allocation4], 1

</llo_original>
